<compile_context>
chip_gen: v6e
topology: v6e:2x2x1
jax: 0.10.0
libtpu: 0.0.40
codegen_flags: <defaults>
</compile_context>

<pallas_src>
import math

import jax
import jax.numpy as jnp
from jax.experimental import pallas as pl
from jax.experimental.pallas import tpu as pltpu


def make_positional_encoding(d_model: int, max_len: int = 4028,
                             dtype=jnp.float32) -> jnp.ndarray:
    """Sinusoidal table identical to the PyTorch __init__ (built once).

    Computed in f32 and cast once to the activation dtype so the forward
    pass never pays a per-call astype pass over HBM.
    NOTE: max_len defaults to 4028 to match the original module exactly.
    """
    position = jnp.arange(0, max_len, dtype=jnp.float32)[:, None]            # (max_len, 1)
    div_term = jnp.exp(
        jnp.arange(0, d_model, 2, dtype=jnp.float32) * (-math.log(10000.0) / d_model)
    )                                                                         # (ceil(D/2),)
    angles = position * div_term                                              # (max_len, ceil(D/2))
    pe = jnp.zeros((max_len, d_model), dtype=jnp.float32)
    pe = pe.at[:, 0::2].set(jnp.sin(angles))
    # Odd d_model: the cos half is truncated here (the canonical PyTorch code
    # errors for odd d_model; even d_model matches it exactly).
    pe = pe.at[:, 1::2].set(jnp.cos(angles)[:, : d_model // 2])
    return pe[None, :, :].astype(dtype)                                      # (1, max_len, D)


def _add_pe_kernel(x_ref, pe_ref, o_ref):
    # (tile_rows, L) tiles; the size-1 batch dim is squeezed by the BlockSpec.
    o_ref[...] = x_ref[...] + pe_ref[...]


def _choose_lane_width(n: int) -> int:
    """Largest L (multiple of 128, <= 2048) dividing n with n // L >= 8, else 0.

    Requiring >= 8 rows keeps the sublane dim fully packed (no 8x vreg/VMEM
    padding waste, no sublane-masked stores)."""
    for lane in (2048, 1024, 512, 256, 128):
        if n % lane == 0 and n // lane >= 8:
            return lane
    return 0


def _pallas_broadcast_add(x3, pe3, tile_rows, *, deep_pipeline):
    B, R, L = x3.shape
    num_row_tiles = pl.cdiv(R, tile_rows)
    # `None` squeezes the size-1 batch dim out of the kernel refs, keeping the
    # (8, 128) tiling constraint on the (rows, lanes) dims where it belongs.
    block = (None, tile_rows, L)

    # 3-deep buffering only on the two large per-batch streams; pe keeps the
    # default double-buffering (it is reused across b anyway).
    xo_kwargs = {"pipeline_mode": pl.Buffered(3)} if deep_pipeline else {}
    in_specs = [
        pl.BlockSpec(block, lambda t, b: (b, t, 0), **xo_kwargs),   # x
        pl.BlockSpec(block, lambda t, b: (0, t, 0)),                # pe (shared across b)
    ]
    out_spec = pl.BlockSpec(block, lambda t, b: (b, t, 0), **xo_kwargs)

    return pl.pallas_call(
        _add_pe_kernel,
        out_shape=jax.ShapeDtypeStruct((B, R, L), x3.dtype),
        grid=(num_row_tiles, B),
        in_specs=in_specs,
        out_specs=out_spec,
        compiler_params=pltpu.CompilerParams(
            # Row tiles split across TensorCores; batch stays sequential per
            # core so the b-constant pe index_map keeps skipping repeat DMAs.
            dimension_semantics=("parallel", "arbitrary"),
            vmem_limit_bytes=48 * 1024 * 1024,
        ),
    )(x3, pe3)


def _tiled_broadcast_add(x3: jnp.ndarray, pe3: jnp.ndarray) -> jnp.ndarray:
    """x3: (B, R, L); pe3: (1, R, L); L a multiple of 128. Returns x3 + pe3."""
    B, R, L = x3.shape
    itemsize = jnp.dtype(x3.dtype).itemsize
    # Packed-sublane granularity: 8 rows f32, 16 rows bf16, 32 rows int8/fp8,
    # so block boundaries never split packed row pairs/quads.
    align = max(8, 32 // itemsize)

    # ~4 MiB blocks amortize the ~0.35 us per-grid-step overhead.
    # 3 streams x <= 3 buffers x <= 4 MiB <= ~32 MiB of VMEM, inside the
    # 48 MiB scoped limit on v5e / v6e / v7x alike.
    target_rows = max(1, (4 * 1024 * 1024) // (L * itemsize))
    if target_rows >= R:
        tile_rows = R                                   # full extent: always legal
    else:
        tile_rows = max(align, (target_rows // align) * align)

    try:
        # Deeper pipelining hides DMA issue latency on v7x; neutral elsewhere.
        return _pallas_broadcast_add(x3, pe3, tile_rows, deep_pipeline=True)
    except Exception:
        # Pallas builds without pipeline_mode support: proven 2-buffer config.
        return _pallas_broadcast_add(x3, pe3, tile_rows, deep_pipeline=False)


_SMALL_BYTES = 256 * 1024   # below this, a fused XLA add beats a kernel launch


def positional_encoding_forward(x: jnp.ndarray, pe: jnp.ndarray) -> jnp.ndarray:
    """x: (B, S, D); pe: (1, max_len, D). Returns x + pe[:, :S, :]."""
    B, S, D = x.shape
    if S > pe.shape[1]:
        raise ValueError(f"sequence length {S} exceeds max_len {pe.shape[1]}")

    pe_slice = pe[:, :S, :]
    if pe_slice.dtype != x.dtype:
        # Safety net only — build the table in the activation dtype (see
        # make_positional_encoding) so this per-call cast pass never runs.
        pe_slice = pe_slice.astype(x.dtype)

    itemsize = jnp.dtype(x.dtype).itemsize
    if B * S * D * itemsize < _SMALL_BYTES:
        return x + pe_slice                       # tiny: launch overhead dominates

    n = S * D
    lane = _choose_lane_width(n)
    if lane:
        # Lane-dense path: each (S, D) plane viewed as (rows, lane),
        # lane a big multiple of 128 -> unmasked vst, fully packed vregs.
        rows = n // lane
        out = _tiled_broadcast_add(x.reshape(B, rows, lane),
                                   pe_slice.reshape(1, rows, lane))
        return out.reshape(B, S, D)

    # S*D not a multiple of 128: pad the flattened row to the next multiple of
    # 128 so stores stay unmasked, run lane-dense, slice the padding off.
    n_pad = pl.cdiv(n, 128) * 128
    lane = _choose_lane_width(n_pad)
    if lane == 0:
        return x + pe_slice                       # degenerate small plane: plain XLA
    rows = n_pad // lane
    pad = n_pad - n
    x_flat = jnp.pad(x.reshape(B, n), ((0, 0), (0, pad)))
    pe_flat = jnp.pad(pe_slice.reshape(1, n), ((0, 0), (0, pad)))
    out = _tiled_broadcast_add(x_flat.reshape(B, rows, lane),
                               pe_flat.reshape(1, rows, lane))
    return out.reshape(B, n_pad)[:, :n].reshape(B, S, D)


if __name__ == "__main__":
    key = jax.random.PRNGKey(0)
    max_len = 4028

    # Case 1: tiny module-like shape (takes the fused-XLA bailout path).
    B, S, D = 2, 8, 32
    pe = make_positional_encoding(D, max_len, dtype=jnp.float32)
    x = jax.random.normal(key, (B, S, D), dtype=jnp.float32)
    out = jax.block_until_ready(positional_encoding_forward(x, pe))
    ref = x + pe[:, :S, :]
    assert out.shape == (B, S, D)
    assert jnp.allclose(out, ref, atol=1e-6), "mismatch (tiny path)"

    # Case 2: exercises the lane-dense Pallas path (S*D multiple of 128).
    B2, S2, D2 = 2, 512, 128
    pe2 = make_positional_encoding(D2, max_len, dtype=jnp.float32)
    x2 = jax.random.normal(jax.random.fold_in(key, 1), (B2, S2, D2), dtype=jnp.float32)
    out2 = jax.block_until_ready(positional_encoding_forward(x2, pe2))
    ref2 = x2 + pe2[:, :S2, :]
    assert out2.shape == (B2, S2, D2)
    assert jnp.allclose(out2, ref2, atol=1e-5), "mismatch (lane-dense path)"

    # Case 3: exercises the pad-to-128 Pallas path (S*D not a multiple of 128).
    B3, S3, D3 = 4, 300, 60
    pe3 = make_positional_encoding(D3, max_len, dtype=jnp.float32)
    x3 = jax.random.normal(jax.random.fold_in(key, 2), (B3, S3, D3), dtype=jnp.float32)
    out3 = jax.block_until_ready(positional_encoding_forward(x3, pe3))
    ref3 = x3 + pe3[:, :S3, :]
    assert out3.shape == (B3, S3, D3)
    assert jnp.allclose(out3, ref3, atol=1e-5), "mismatch (padded path)"

    print("KERNEL_OK")
</pallas_src>

<mosaic_0001>
module attributes {stable_mosaic.version = 11 : i64} {
  func.func @_add_pe_kernel(%arg0: i32, %arg1: i32, %arg2: memref<1x32x2048xf32, #tpu.memory_space<vmem>>, %arg3: memref<1x32x2048xf32, #tpu.memory_space<vmem>>, %arg4: memref<1x32x2048xf32, #tpu.memory_space<vmem>>) attributes {dimension_semantics = [#tpu.dimension_semantics<parallel>, #tpu.dimension_semantics<arbitrary>], iteration_bounds = array<i64: 1, 2>, scalar_prefetch = 0 : i64, scratch_operands = 0 : i64, tpu.core_type = #tpu.core_type<tc>, window_params = [{transform_indices = @transform_0, window_bounds = array<i64: 1, 32, 2048>}, {transform_indices = @transform_1, window_bounds = array<i64: 1, 32, 2048>}, {transform_indices = @transform_2, window_bounds = array<i64: 1, 32, 2048>}]} {
    %c0 = arith.constant 0 : index
    %c0_0 = arith.constant 0 : index
    %c0_1 = arith.constant 0 : index
    %0 = vector.load %arg2[%c0, %c0_0, %c0_1] : memref<1x32x2048xf32, #tpu.memory_space<vmem>>, vector<1x32x2048xf32>
    %1 = vector.shape_cast %0 : vector<1x32x2048xf32> to vector<32x2048xf32>
    %c0_2 = arith.constant 0 : index
    %c0_3 = arith.constant 0 : index
    %c0_4 = arith.constant 0 : index
    %2 = vector.load %arg3[%c0_2, %c0_3, %c0_4] : memref<1x32x2048xf32, #tpu.memory_space<vmem>>, vector<1x32x2048xf32>
    %3 = vector.shape_cast %2 : vector<1x32x2048xf32> to vector<32x2048xf32>
    %4 = arith.addf %1, %3 : vector<32x2048xf32>
    %c0_5 = arith.constant 0 : index
    %c0_6 = arith.constant 0 : index
    %c0_7 = arith.constant 0 : index
    %5 = vector.load %arg4[%c0_5, %c0_6, %c0_7] : memref<1x32x2048xf32, #tpu.memory_space<vmem>>, vector<1x32x2048xf32>
    %6 = vector.shape_cast %5 : vector<1x32x2048xf32> to vector<32x2048xf32>
    %7 = vector.shape_cast %4 : vector<32x2048xf32> to vector<1x32x2048xf32>
    tpu.vector_store %arg4[%c0_5, %c0_6, %c0_7], %7 {strides = array<i32>} : memref<1x32x2048xf32, #tpu.memory_space<vmem>>, vector<1x32x2048xf32>,
    return
  }
  func.func @transform_0(%arg0: i32, %arg1: i32) -> (i32, i32, i32) {
    %c0_i32 = arith.constant 0 : i32
    %c0_i32_0 = arith.constant 0 : i32
    return %arg1, %arg0, %c0_i32 : i32, i32, i32
  }
  func.func @transform_1(%arg0: i32, %arg1: i32) -> (i32, i32, i32) {
    %c0_i32 = arith.constant 0 : i32
    %c0_i32_0 = arith.constant 0 : i32
    %c0_i32_1 = arith.constant 0 : i32
    return %c0_i32, %arg0, %c0_i32_0 : i32, i32, i32
  }
  func.func @transform_2(%arg0: i32, %arg1: i32) -> (i32, i32, i32) {
    %c0_i32 = arith.constant 0 : i32
    %c0_i32_0 = arith.constant 0 : i32
    return %arg1, %arg0, %c0_i32 : i32, i32, i32
  }
}

</mosaic_0001>

<llo_original>
// kernel: tpu_custom_call.1
$region0: #{tpu_custom_call.1}
  #allocation0 [shape = 'u32[]', space=smem, size = 0x4, offset = 0x4, fixed_abs, tag = 'smem constant byte address 0x4 - core index']
  #allocation1 [shape = 'u32[144,128]{1,0:T(1,128)}', space=vmem, size = 0x12000, scoped, tag = 'internal scratch']
  %s0 = inlined_call_operand.hbm [shape: f32[2,32,2048], index: 0, kind: input, shape index: {}]
  %s1 = inlined_call_operand.hbm [shape: f32[1,32,2048], index: 1, kind: input, shape index: {}]
  %s2 = inlined_call_operand.hbm [shape: f32[2,32,2048], index: 2, kind: output, shape index: {}]
  %s3 = sld [smem:[#allocation0]]
  $region49: #{tpu_custom_call.1} parent=0
    _
  %s5 = ssub.s32 1, %s3
  %s6 = scalar_select 0, %s5, %s3
  $region1: #{tpu_custom_call.1} parent=0
    #allocation2 [shape = 'u8[524288]{0}', space=vmem, size = 0x80000, scoped, tag = 'input window, operand 0']
    #allocation3 [shape = 's32[2]{0}', space=sflag, size = 0x8, scoped, tag = 'scoped memory for tpu_custom_call.1']
    #allocation4 [shape = 's32[2]{0}', space=sflag, size = 0x8, scoped, tag = 'scoped memory for tpu_custom_call.1']
    #allocation5 [shape = 'u8[262144]{0}', space=vmem, size = 0x40000, scoped, tag = 'input window, operand 1, single buffered']
    #allocation6 [shape = 's32[1]{0}', space=sflag, size = 0x4, scoped, tag = 'scoped memory for tpu_custom_call.1']
    #allocation7 [shape = 'u8[524288]{0}', space=vmem, size = 0x80000, scoped, tag = 'output window, operand 0']
    %7 = vsyncpa [#allocation3], 0
    %s8 = scalar_lea.sflag [#allocation3], 1
    %9 = vsyncpa %s8, 0
    %10 = vsyncpa [#allocation6], 0
    %11 = vsyncpa [#allocation4], 0
    %s12 = scalar_lea.sflag [#allocation4], 1
    %13 = vsyncpa %s12, 0
    loop: start=0, step=1, limit=4
    $region2: #{tpu_custom_call.1} parent=1 // loop_pre_header
      _
    $region3: #{tpu_custom_call.1} parent=1 // loop_header
      %s15 = sphi 0, %s19
      %p16 = scmp.ge.s32.totalorder %s15, 4
      %s22 = sphi 0, %s34
      %s23 = sphi 0, %s30
      %s24 = sphi 0, %s22
      %s25 = sphi 0, %s23
      %s26 = sphi 0, %s24
      %s27 = sphi 0, %s25
      %s39 = sphi 0, %s41
      %s42 = sphi 0, %s39
      %s43 = sphi 0, %s42
      %s59 = sphi 0, %s43
      %s65 = sphi 0, %s67
      %s68 = sphi 0, %s65
      %s69 = sphi 0, %s68
      %s85 = sphi 0, %s69
      %s93 = sphi 0, %s95
      %s96 = sphi 0, %s93
      %s97 = sphi 0, %s96
      %s113 = sphi 0, %s97
    $region4: #{tpu_custom_call.1} parent=1 // loop_header_branch
      %18 = sbr.rel (%p16) target = $region8
    $region5: #{tpu_custom_call.1} parent=1 // loop_body
      %s20 = ssub.s32 %s15, 1
      %s21 = ssub.s32 %s15, 2
      %s28 = sadd.s32 1, %s23
      %p29 = scmp.ge.s32.totalorder %s28, 2
      %s30 = scalar_select %p29, 0, %s28
      %s31 = sadd.s32 1, %s22
      %s32 = scalar_select %p29, %s31, %s22
      %p33 = scmp.ge.s32.totalorder %s32, 1
      %s34 = scalar_select %p33, 0, %s32
      %s35 = ssub.s32 %s23, %s30
      %s36 = ssub.s32 %s22, %s34
      %s37 = sor.u32 %s35, %s36
      %p38 = scmp.eq.s32.totalorder %s37, 0
      %s40 = sadd.s32 %s39, 1
      %s41 = scalar_select %p38, %s39, %s40
      %p44 = pneg %p38
      %p45 = scmp.eq.s32.totalorder %s15, 1
      %p46 = por %p44, %p45
      %p47 = scmp.ne.s32.totalorder %s39, %s42
      %p48 = scmp.eq.s32.totalorder %s15, 0
      %p49 = por %p47, %p48
      %p50 = scmp.ne.s32.totalorder %s39, %s42
      %p51 = scmp.eq.s32.totalorder %s20, 1
      %p52 = por %p50, %p51
      %p53 = scmp.ne.s32.totalorder %s42, %s43
      %p54 = scmp.eq.s32.totalorder %s20, 0
      %p55 = por %p53, %p54
      %p56 = scmp.ne.s32.totalorder %s42, %s43
      %p57 = scmp.eq.s32.totalorder %s21, 1
      %p58 = por %p56, %p57
      %p60 = scmp.ne.s32.totalorder %s43, %s59
      %p61 = scmp.eq.s32.totalorder %s21, 0
      %p62 = por %p60, %p61
      %s63 = ssub.s32 %s22, %s34
      %p64 = scmp.eq.s32.totalorder %s63, 0
      %s66 = sadd.s32 %s65, 1
      %s67 = scalar_select %p64, %s65, %s66
      %p70 = pneg %p64
      %p71 = scmp.eq.s32.totalorder %s15, 1
      %p72 = por %p70, %p71
      %p73 = scmp.ne.s32.totalorder %s65, %s68
      %p74 = scmp.eq.s32.totalorder %s15, 0
      %p75 = por %p73, %p74
      %p76 = scmp.ne.s32.totalorder %s65, %s68
      %p77 = scmp.eq.s32.totalorder %s20, 1
      %p78 = por %p76, %p77
      %p79 = scmp.ne.s32.totalorder %s68, %s69
      %p80 = scmp.eq.s32.totalorder %s20, 0
      %p81 = por %p79, %p80
      %p82 = scmp.ne.s32.totalorder %s68, %s69
      %p83 = scmp.eq.s32.totalorder %s21, 1
      %p84 = por %p82, %p83
      %p86 = scmp.ne.s32.totalorder %s69, %s85
      %p87 = scmp.eq.s32.totalorder %s21, 0
      %p88 = por %p86, %p87
      %s89 = ssub.s32 %s23, %s30
      %s90 = ssub.s32 %s22, %s34
      %s91 = sor.u32 %s89, %s90
      %p92 = scmp.eq.s32.totalorder %s91, 0
      %s94 = sadd.s32 %s93, 1
      %s95 = scalar_select %p92, %s93, %s94
      %p98 = pneg %p92
      %p99 = scmp.eq.s32.totalorder %s15, 1
      %p100 = por %p98, %p99
      %p101 = scmp.ne.s32.totalorder %s93, %s96
      %p102 = scmp.eq.s32.totalorder %s15, 0
      %p103 = por %p101, %p102
      %p104 = scmp.ne.s32.totalorder %s93, %s96
      %p105 = scmp.eq.s32.totalorder %s20, 1
      %p106 = por %p104, %p105
      %p107 = scmp.ne.s32.totalorder %s96, %s97
      %p108 = scmp.eq.s32.totalorder %s20, 0
      %p109 = por %p107, %p108
      %p110 = scmp.ne.s32.totalorder %s96, %s97
      %p111 = scmp.eq.s32.totalorder %s21, 1
      %p112 = por %p110, %p111
      %p114 = scmp.ne.s32.totalorder %s97, %s113
      %p115 = scmp.eq.s32.totalorder %s21, 0
      %p116 = por %p114, %p115
      %p117 = scmp.le.s32.totalorder 1, %s15
      %p118 = scmp.lt.s32.totalorder %s15, 3
      %p119 = pnand %p117, %p118
      %p120 = pneg %p119
      // Predicated region
      $region9: #{tpu_custom_call.1} parent=5 // pred_check
        _
      $region10: #{tpu_custom_call.1} parent=5 // pred_check_branch
        %122 = sbr.rel (%p119) target = $region12
      $region11: #{tpu_custom_call.1} parent=5 // pred_region
        %s123 = ssub.s32 %s15, 1
        // Predicated region
        $region13: #{tpu_custom_call.1} parent=11 // pred_check
          %p124 = pneg %p81
        $region14: #{tpu_custom_call.1} parent=11 // pred_check_branch
          %126 = sbr.rel (%p124) target = $region16
        $region15: #{tpu_custom_call.1} parent=11 // pred_region
          %s127 = smul.u32 4, %s24
          %s129 = ssub.s32 8192, 8192
          %130 = vsyncadd [#allocation6], %s129
          %s131 = smul.addr %s127, 16
          %s132 = smul.addr %s131, 128
          %s133 = scalar_lea.hbm %s1, %s132
          %s134 = sshll.u32 [#allocation5], 4
          %s135 = int_to_ptr.vmem [resolvable:$true] %s134
          %140 = dma.hbm_to_vmem [thread:$0]  %s133, 8192, %s135, [#allocation6], 2048, 2048, 128
        $region16: #{tpu_custom_call.1} parent=11 // pred_fallthru
          _
      $region12: #{tpu_custom_call.1} parent=5 // pred_fallthru
        _
      %p141 = scmp.lt.s32.totalorder %s15, 2
      // Predicated region
      $region17: #{tpu_custom_call.1} parent=5 // pred_check
        %p142 = pneg %p141
      $region18: #{tpu_custom_call.1} parent=5 // pred_check_branch
        %144 = sbr.rel (%p142) target = $region20
      $region19: #{tpu_custom_call.1} parent=5 // pred_region
        // Predicated region
        $region21: #{tpu_custom_call.1} parent=19 // pred_check
          %p145 = pneg %p49
        $region22: #{tpu_custom_call.1} parent=19 // pred_check_branch
          %147 = sbr.rel (%p145) target = $region24
        $region23: #{tpu_custom_call.1} parent=19 // pred_region
          %s148 = sand.u32 %s39, 1
          %s149 = scalar_lea.sflag [#allocation3], %s148
          %s150 = sand.u32 %s39, 1
          %s151 = smul.addr %s150, 512
          %s152 = scalar_lea.vmem [#allocation2], %s151
          %s153 = smul.u32 4, %s22
          %s155 = ssub.s32 8192, 8192
          %156 = vsyncadd %s149, %s155
          %s157 = smul.addr %s153, 16
          %s158 = smul.addr %s23, 64
          %s159 = sadd.s32 %s157, %s158
          %s160 = smul.addr %s159, 128
          %s161 = scalar_lea.hbm %s0, %s160
          %s162 = sshll.u32 %s152, 4
          %s163 = int_to_ptr.vmem [resolvable:$true] %s162
          %168 = dma.hbm_to_vmem [thread:$0]  %s161, 8192, %s163, %s149, 2048, 2048, 128
        $region24: #{tpu_custom_call.1} parent=19 // pred_fallthru
          _
      $region20: #{tpu_custom_call.1} parent=5 // pred_fallthru
        _
      %p169 = scmp.le.s32.totalorder 1, %s15
      %p170 = scmp.lt.s32.totalorder %s15, 3
      %p171 = pnand %p169, %p170
      %p172 = pneg %p171
      // Predicated region
      $region25: #{tpu_custom_call.1} parent=5 // pred_check
        _
      $region26: #{tpu_custom_call.1} parent=5 // pred_check_branch
        %174 = sbr.rel (%p171) target = $region28
      $region27: #{tpu_custom_call.1} parent=5 // pred_region
        %s175 = ssub.s32 %s15, 1
        %s176 = sand.u32 %s42, 1
        %s177 = scalar_lea.sflag [#allocation3], %s176
        %s178 = sand.u32 %s42, 1
        %s179 = smul.addr %s178, 512
        %s180 = scalar_lea.vmem [#allocation2], %s179
        // Predicated region
        $region29: #{tpu_custom_call.1} parent=27 // pred_check
          %p181 = pneg %p55
        $region30: #{tpu_custom_call.1} parent=27 // pred_check_branch
          %183 = sbr.rel (%p181) target = $region32
        $region31: #{tpu_custom_call.1} parent=27 // pred_region
          %184 = dma.done %s177, 8192
        $region32: #{tpu_custom_call.1} parent=27 // pred_fallthru
          _
        // Predicated region
        $region33: #{tpu_custom_call.1} parent=27 // pred_check
          %p185 = pneg %p81
        $region34: #{tpu_custom_call.1} parent=27 // pred_check_branch
          %187 = sbr.rel (%p185) target = $region36
        $region35: #{tpu_custom_call.1} parent=27 // pred_region
          %188 = dma.done [#allocation6], 8192
        $region36: #{tpu_custom_call.1} parent=27 // pred_fallthru
          _
        %s189 = sand.u32 %s42, 1
        %s190 = scalar_lea.sflag [#allocation3], %s189
        %s191 = sand.u32 %s42, 1
        %s192 = smul.addr %s191, 512
        %s193 = scalar_lea.vmem [#allocation2], %s192
        %p194 = pneg %p55
        %p195 = pneg %p52
        %p196 = pneg %p81
        %p197 = pneg %p78
        %p198 = pneg %p109
        %p199 = pneg %p106
        %s200 = sand.u32 %s96, 1
        %s201 = scalar_lea.sflag [#allocation4], %s200
        %s202 = sand.u32 %s96, 1
        %s203 = smul.addr %s202, 512
        %s204 = scalar_lea.vmem [#allocation7], %s203
        %s205 = smul.u32 4, %s24
        %s206 = smul.u32 4, %s24
        %s207 = smul.u32 4, %s24
        %v208 = vld [vmem:[%s180] sm:$0xff]
        %v209 = vld [vmem:[%s180 + $0x8] sm:$0xff]
        %v210 = vld [vmem:[%s180 + $0x10] sm:$0xff]
        %v211 = vld [vmem:[%s180 + $0x18] sm:$0xff]
        %v212 = vld [vmem:[%s180 + $0x20] sm:$0xff]
        %v213 = vld [vmem:[%s180 + $0x28] sm:$0xff]
        %v214 = vld [vmem:[%s180 + $0x30] sm:$0xff]
        %v215 = vld [vmem:[%s180 + $0x38] sm:$0xff]
        %v216 = vld [vmem:[%s180 + $0x40] sm:$0xff]
        %v217 = vld [vmem:[%s180 + $0x48] sm:$0xff]
        %v218 = vld [vmem:[%s180 + $0x50] sm:$0xff]
        %v219 = vld [vmem:[%s180 + $0x58] sm:$0xff]
        %v220 = vld [vmem:[%s180 + $0x60] sm:$0xff]
        %v221 = vld [vmem:[%s180 + $0x68] sm:$0xff]
        %v222 = vld [vmem:[%s180 + $0x70] sm:$0xff]
        %v223 = vld [vmem:[%s180 + $0x78] sm:$0xff]
        %v224 = vld [vmem:[%s180 + $0x80] sm:$0xff]
        %v225 = vld [vmem:[%s180 + $0x88] sm:$0xff]
        %v226 = vld [vmem:[%s180 + $0x90] sm:$0xff]
        %v227 = vld [vmem:[%s180 + $0x98] sm:$0xff]
        %v228 = vld [vmem:[%s180 + $0xa0] sm:$0xff]
        %v229 = vld [vmem:[%s180 + $0xa8] sm:$0xff]
        %v230 = vld [vmem:[%s180 + $0xb0] sm:$0xff]
        %v231 = vld [vmem:[%s180 + $0xb8] sm:$0xff]
        %v232 = vld [vmem:[%s180 + $0xc0] sm:$0xff]
        %v233 = vld [vmem:[%s180 + $0xc8] sm:$0xff]
        %v234 = vld [vmem:[%s180 + $0xd0] sm:$0xff]
        %v235 = vld [vmem:[%s180 + $0xd8] sm:$0xff]
        %v236 = vld [vmem:[%s180 + $0xe0] sm:$0xff]
        %v237 = vld [vmem:[%s180 + $0xe8] sm:$0xff]
        %v238 = vld [vmem:[%s180 + $0xf0] sm:$0xff]
        %v239 = vld [vmem:[%s180 + $0xf8] sm:$0xff]
        %v240 = vld [vmem:[%s180 + $0x100] sm:$0xff]
        %v241 = vld [vmem:[%s180 + $0x108] sm:$0xff]
        %v242 = vld [vmem:[%s180 + $0x110] sm:$0xff]
        %v243 = vld [vmem:[%s180 + $0x118] sm:$0xff]
        %v244 = vld [vmem:[%s180 + $0x120] sm:$0xff]
        %v245 = vld [vmem:[%s180 + $0x128] sm:$0xff]
        %v246 = vld [vmem:[%s180 + $0x130] sm:$0xff]
        %v247 = vld [vmem:[%s180 + $0x138] sm:$0xff]
        %v248 = vld [vmem:[%s180 + $0x140] sm:$0xff]
        %v249 = vld [vmem:[%s180 + $0x148] sm:$0xff]
        %v250 = vld [vmem:[%s180 + $0x150] sm:$0xff]
        %v251 = vld [vmem:[%s180 + $0x158] sm:$0xff]
        %v252 = vld [vmem:[%s180 + $0x160] sm:$0xff]
        %v253 = vld [vmem:[%s180 + $0x168] sm:$0xff]
        %v254 = vld [vmem:[%s180 + $0x170] sm:$0xff]
        %v255 = vld [vmem:[%s180 + $0x178] sm:$0xff]
        %v256 = vld [vmem:[%s180 + $0x180] sm:$0xff]
        %v257 = vld [vmem:[%s180 + $0x188] sm:$0xff]
        %v258 = vld [vmem:[%s180 + $0x190] sm:$0xff]
        %v259 = vld [vmem:[%s180 + $0x198] sm:$0xff]
        %v260 = vld [vmem:[%s180 + $0x1a0] sm:$0xff]
        %v261 = vld [vmem:[%s180 + $0x1a8] sm:$0xff]
        %v262 = vld [vmem:[%s180 + $0x1b0] sm:$0xff]
        %v263 = vld [vmem:[%s180 + $0x1b8] sm:$0xff]
        %v264 = vld [vmem:[%s180 + $0x1c0] sm:$0xff]
        %v265 = vld [vmem:[%s180 + $0x1c8] sm:$0xff]
        %v266 = vld [vmem:[%s180 + $0x1d0] sm:$0xff]
        %v267 = vld [vmem:[%s180 + $0x1d8] sm:$0xff]
        %v268 = vld [vmem:[%s180 + $0x1e0] sm:$0xff]
        %v269 = vld [vmem:[%s180 + $0x1e8] sm:$0xff]
        %v270 = vld [vmem:[%s180 + $0x1f0] sm:$0xff]
        %v271 = vld [vmem:[%s180 + $0x1f8] sm:$0xff]
        %v272 = vld [vmem:[#allocation5] sm:$0xff]
        %v273 = vld [vmem:[#allocation5 + $0x8] sm:$0xff]
        %v274 = vld [vmem:[#allocation5 + $0x10] sm:$0xff]
        %v275 = vld [vmem:[#allocation5 + $0x18] sm:$0xff]
        %v276 = vld [vmem:[#allocation5 + $0x20] sm:$0xff]
        %v277 = vld [vmem:[#allocation5 + $0x28] sm:$0xff]
        %v278 = vld [vmem:[#allocation5 + $0x30] sm:$0xff]
        %v279 = vld [vmem:[#allocation5 + $0x38] sm:$0xff]
        %v280 = vld [vmem:[#allocation5 + $0x40] sm:$0xff]
        %v281 = vld [vmem:[#allocation5 + $0x48] sm:$0xff]
        %v282 = vld [vmem:[#allocation5 + $0x50] sm:$0xff]
        %v283 = vld [vmem:[#allocation5 + $0x58] sm:$0xff]
        %v284 = vld [vmem:[#allocation5 + $0x60] sm:$0xff]
        %v285 = vld [vmem:[#allocation5 + $0x68] sm:$0xff]
        %v286 = vld [vmem:[#allocation5 + $0x70] sm:$0xff]
        %v287 = vld [vmem:[#allocation5 + $0x78] sm:$0xff]
        %v288 = vld [vmem:[#allocation5 + $0x80] sm:$0xff]
        %v289 = vld [vmem:[#allocation5 + $0x88] sm:$0xff]
        %v290 = vld [vmem:[#allocation5 + $0x90] sm:$0xff]
        %v291 = vld [vmem:[#allocation5 + $0x98] sm:$0xff]
        %v292 = vld [vmem:[#allocation5 + $0xa0] sm:$0xff]
        %v293 = vld [vmem:[#allocation5 + $0xa8] sm:$0xff]
        %v294 = vld [vmem:[#allocation5 + $0xb0] sm:$0xff]
        %v295 = vld [vmem:[#allocation5 + $0xb8] sm:$0xff]
        %v296 = vld [vmem:[#allocation5 + $0xc0] sm:$0xff]
        %v297 = vld [vmem:[#allocation5 + $0xc8] sm:$0xff]
        %v298 = vld [vmem:[#allocation5 + $0xd0] sm:$0xff]
        %v299 = vld [vmem:[#allocation5 + $0xd8] sm:$0xff]
        %v300 = vld [vmem:[#allocation5 + $0xe0] sm:$0xff]
        %v301 = vld [vmem:[#allocation5 + $0xe8] sm:$0xff]
        %v302 = vld [vmem:[#allocation5 + $0xf0] sm:$0xff]
        %v303 = vld [vmem:[#allocation5 + $0xf8] sm:$0xff]
        %v304 = vld [vmem:[#allocation5 + $0x100] sm:$0xff]
        %v305 = vld [vmem:[#allocation5 + $0x108] sm:$0xff]
        %v306 = vld [vmem:[#allocation5 + $0x110] sm:$0xff]
        %v307 = vld [vmem:[#allocation5 + $0x118] sm:$0xff]
        %v308 = vld [vmem:[#allocation5 + $0x120] sm:$0xff]
        %v309 = vld [vmem:[#allocation5 + $0x128] sm:$0xff]
        %v310 = vld [vmem:[#allocation5 + $0x130] sm:$0xff]
        %v311 = vld [vmem:[#allocation5 + $0x138] sm:$0xff]
        %v312 = vld [vmem:[#allocation5 + $0x140] sm:$0xff]
        %v313 = vld [vmem:[#allocation5 + $0x148] sm:$0xff]
        %v314 = vld [vmem:[#allocation5 + $0x150] sm:$0xff]
        %v315 = vld [vmem:[#allocation5 + $0x158] sm:$0xff]
        %v316 = vld [vmem:[#allocation5 + $0x160] sm:$0xff]
        %v317 = vld [vmem:[#allocation5 + $0x168] sm:$0xff]
        %v318 = vld [vmem:[#allocation5 + $0x170] sm:$0xff]
        %v319 = vld [vmem:[#allocation5 + $0x178] sm:$0xff]
        %v320 = vld [vmem:[#allocation5 + $0x180] sm:$0xff]
        %v321 = vld [vmem:[#allocation5 + $0x188] sm:$0xff]
        %v322 = vld [vmem:[#allocation5 + $0x190] sm:$0xff]
        %v323 = vld [vmem:[#allocation5 + $0x198] sm:$0xff]
        %v324 = vld [vmem:[#allocation5 + $0x1a0] sm:$0xff]
        %v325 = vld [vmem:[#allocation5 + $0x1a8] sm:$0xff]
        %v326 = vld [vmem:[#allocation5 + $0x1b0] sm:$0xff]
        %v327 = vld [vmem:[#allocation5 + $0x1b8] sm:$0xff]
        %v328 = vld [vmem:[#allocation5 + $0x1c0] sm:$0xff]
        %v329 = vld [vmem:[#allocation5 + $0x1c8] sm:$0xff]
        %v330 = vld [vmem:[#allocation5 + $0x1d0] sm:$0xff]
        %v331 = vld [vmem:[#allocation5 + $0x1d8] sm:$0xff]
        %v332 = vld [vmem:[#allocation5 + $0x1e0] sm:$0xff]
        %v333 = vld [vmem:[#allocation5 + $0x1e8] sm:$0xff]
        %v334 = vld [vmem:[#allocation5 + $0x1f0] sm:$0xff]
        %v335 = vld [vmem:[#allocation5 + $0x1f8] sm:$0xff]
        %v336 = vadd.f32 %v208, %v272
        %v337 = vadd.f32 %v209, %v273
        %v338 = vadd.f32 %v210, %v274
        %v339 = vadd.f32 %v211, %v275
        %v340 = vadd.f32 %v212, %v276
        %v341 = vadd.f32 %v213, %v277
        %v342 = vadd.f32 %v214, %v278
        %v343 = vadd.f32 %v215, %v279
        %v344 = vadd.f32 %v216, %v280
        %v345 = vadd.f32 %v217, %v281
        %v346 = vadd.f32 %v218, %v282
        %v347 = vadd.f32 %v219, %v283
        %v348 = vadd.f32 %v220, %v284
        %v349 = vadd.f32 %v221, %v285
        %v350 = vadd.f32 %v222, %v286
        %v351 = vadd.f32 %v223, %v287
        %v352 = vadd.f32 %v224, %v288
        %v353 = vadd.f32 %v225, %v289
        %v354 = vadd.f32 %v226, %v290
        %v355 = vadd.f32 %v227, %v291
        %v356 = vadd.f32 %v228, %v292
        %v357 = vadd.f32 %v229, %v293
        %v358 = vadd.f32 %v230, %v294
        %v359 = vadd.f32 %v231, %v295
        %v360 = vadd.f32 %v232, %v296
        %v361 = vadd.f32 %v233, %v297
        %v362 = vadd.f32 %v234, %v298
        %v363 = vadd.f32 %v235, %v299
        %v364 = vadd.f32 %v236, %v300
        %v365 = vadd.f32 %v237, %v301
        %v366 = vadd.f32 %v238, %v302
        %v367 = vadd.f32 %v239, %v303
        %v368 = vadd.f32 %v240, %v304
        %v369 = vadd.f32 %v241, %v305
        %v370 = vadd.f32 %v242, %v306
        %v371 = vadd.f32 %v243, %v307
        %v372 = vadd.f32 %v244, %v308
        %v373 = vadd.f32 %v245, %v309
        %v374 = vadd.f32 %v246, %v310
        %v375 = vadd.f32 %v247, %v311
        %v376 = vadd.f32 %v248, %v312
        %v377 = vadd.f32 %v249, %v313
        %v378 = vadd.f32 %v250, %v314
        %v379 = vadd.f32 %v251, %v315
        %v380 = vadd.f32 %v252, %v316
        %v381 = vadd.f32 %v253, %v317
        %v382 = vadd.f32 %v254, %v318
        %v383 = vadd.f32 %v255, %v319
        %v384 = vadd.f32 %v256, %v320
        %v385 = vadd.f32 %v257, %v321
        %v386 = vadd.f32 %v258, %v322
        %v387 = vadd.f32 %v259, %v323
        %v388 = vadd.f32 %v260, %v324
        %v389 = vadd.f32 %v261, %v325
        %v390 = vadd.f32 %v262, %v326
        %v391 = vadd.f32 %v263, %v327
        %v392 = vadd.f32 %v264, %v328
        %v393 = vadd.f32 %v265, %v329
        %v394 = vadd.f32 %v266, %v330
        %v395 = vadd.f32 %v267, %v331
        %v396 = vadd.f32 %v268, %v332
        %v397 = vadd.f32 %v269, %v333
        %v398 = vadd.f32 %v270, %v334
        %v399 = vadd.f32 %v271, %v335
        %400 = vst [vmem:[%s204] sm:$0xff] %v336
        %401 = vst [vmem:[%s204 + $0x8] sm:$0xff] %v337
        %402 = vst [vmem:[%s204 + $0x10] sm:$0xff] %v338
        %403 = vst [vmem:[%s204 + $0x18] sm:$0xff] %v339
        %404 = vst [vmem:[%s204 + $0x20] sm:$0xff] %v340
        %405 = vst [vmem:[%s204 + $0x28] sm:$0xff] %v341
        %406 = vst [vmem:[%s204 + $0x30] sm:$0xff] %v342
        %407 = vst [vmem:[%s204 + $0x38] sm:$0xff] %v343
        %408 = vst [vmem:[%s204 + $0x40] sm:$0xff] %v344
        %409 = vst [vmem:[%s204 + $0x48] sm:$0xff] %v345
        %410 = vst [vmem:[%s204 + $0x50] sm:$0xff] %v346
        %411 = vst [vmem:[%s204 + $0x58] sm:$0xff] %v347
        %412 = vst [vmem:[%s204 + $0x60] sm:$0xff] %v348
        %413 = vst [vmem:[%s204 + $0x68] sm:$0xff] %v349
        %414 = vst [vmem:[%s204 + $0x70] sm:$0xff] %v350
        %415 = vst [vmem:[%s204 + $0x78] sm:$0xff] %v351
        %416 = vst [vmem:[%s204 + $0x80] sm:$0xff] %v352
        %417 = vst [vmem:[%s204 + $0x88] sm:$0xff] %v353
        %418 = vst [vmem:[%s204 + $0x90] sm:$0xff] %v354
        %419 = vst [vmem:[%s204 + $0x98] sm:$0xff] %v355
        %420 = vst [vmem:[%s204 + $0xa0] sm:$0xff] %v356
        %421 = vst [vmem:[%s204 + $0xa8] sm:$0xff] %v357
        %422 = vst [vmem:[%s204 + $0xb0] sm:$0xff] %v358
        %423 = vst [vmem:[%s204 + $0xb8] sm:$0xff] %v359
        %424 = vst [vmem:[%s204 + $0xc0] sm:$0xff] %v360
        %425 = vst [vmem:[%s204 + $0xc8] sm:$0xff] %v361
        %426 = vst [vmem:[%s204 + $0xd0] sm:$0xff] %v362
        %427 = vst [vmem:[%s204 + $0xd8] sm:$0xff] %v363
        %428 = vst [vmem:[%s204 + $0xe0] sm:$0xff] %v364
        %429 = vst [vmem:[%s204 + $0xe8] sm:$0xff] %v365
        %430 = vst [vmem:[%s204 + $0xf0] sm:$0xff] %v366
        %431 = vst [vmem:[%s204 + $0xf8] sm:$0xff] %v367
        %432 = vst [vmem:[%s204 + $0x100] sm:$0xff] %v368
        %433 = vst [vmem:[%s204 + $0x108] sm:$0xff] %v369
        %434 = vst [vmem:[%s204 + $0x110] sm:$0xff] %v370
        %435 = vst [vmem:[%s204 + $0x118] sm:$0xff] %v371
        %436 = vst [vmem:[%s204 + $0x120] sm:$0xff] %v372
        %437 = vst [vmem:[%s204 + $0x128] sm:$0xff] %v373
        %438 = vst [vmem:[%s204 + $0x130] sm:$0xff] %v374
        %439 = vst [vmem:[%s204 + $0x138] sm:$0xff] %v375
        %440 = vst [vmem:[%s204 + $0x140] sm:$0xff] %v376
        %441 = vst [vmem:[%s204 + $0x148] sm:$0xff] %v377
        %442 = vst [vmem:[%s204 + $0x150] sm:$0xff] %v378
        %443 = vst [vmem:[%s204 + $0x158] sm:$0xff] %v379
        %444 = vst [vmem:[%s204 + $0x160] sm:$0xff] %v380
        %445 = vst [vmem:[%s204 + $0x168] sm:$0xff] %v381
        %446 = vst [vmem:[%s204 + $0x170] sm:$0xff] %v382
        %447 = vst [vmem:[%s204 + $0x178] sm:$0xff] %v383
        %448 = vst [vmem:[%s204 + $0x180] sm:$0xff] %v384
        %449 = vst [vmem:[%s204 + $0x188] sm:$0xff] %v385
        %450 = vst [vmem:[%s204 + $0x190] sm:$0xff] %v386
        %451 = vst [vmem:[%s204 + $0x198] sm:$0xff] %v387
        %452 = vst [vmem:[%s204 + $0x1a0] sm:$0xff] %v388
        %453 = vst [vmem:[%s204 + $0x1a8] sm:$0xff] %v389
        %454 = vst [vmem:[%s204 + $0x1b0] sm:$0xff] %v390
        %455 = vst [vmem:[%s204 + $0x1b8] sm:$0xff] %v391
        %456 = vst [vmem:[%s204 + $0x1c0] sm:$0xff] %v392
        %457 = vst [vmem:[%s204 + $0x1c8] sm:$0xff] %v393
        %458 = vst [vmem:[%s204 + $0x1d0] sm:$0xff] %v394
        %459 = vst [vmem:[%s204 + $0x1d8] sm:$0xff] %v395
        %460 = vst [vmem:[%s204 + $0x1e0] sm:$0xff] %v396
        %461 = vst [vmem:[%s204 + $0x1e8] sm:$0xff] %v397
        %462 = vst [vmem:[%s204 + $0x1f0] sm:$0xff] %v398
        %463 = vst [vmem:[%s204 + $0x1f8] sm:$0xff] %v399
        %s464 = sand.u32 %s96, 1
        %s465 = scalar_lea.sflag [#allocation4], %s464
        %s466 = sand.u32 %s96, 1
        %s467 = smul.addr %s466, 512
        %s468 = scalar_lea.vmem [#allocation7], %s467
        // Predicated region
        $region37: #{tpu_custom_call.1} parent=27 // pred_check
          %p469 = pneg %p106
        $region38: #{tpu_custom_call.1} parent=27 // pred_check_branch
          %471 = sbr.rel (%p469) target = $region40
        $region39: #{tpu_custom_call.1} parent=27 // pred_region
          %s472 = smul.u32 4, %s24
          %s474 = ssub.s32 8192, 8192
          %475 = vsyncadd %s465, %s474
          %s476 = smul.addr %s472, 16
          %s477 = smul.addr %s25, 64
          %s478 = sadd.s32 %s476, %s477
          %s479 = smul.addr %s478, 128
          %s480 = scalar_lea.hbm %s2, %s479
          %s481 = sshll.u32 %s468, 4
          %s482 = int_to_ptr.vmem [resolvable:$true] %s481
          %487 = dma.vmem_to_hbm [thread:$0]  %s482, 8192, %s480, %s465, 2048, 2048, 128
        $region40: #{tpu_custom_call.1} parent=27 // pred_fallthru
          _
      $region28: #{tpu_custom_call.1} parent=5 // pred_fallthru
        _
      %p488 = scmp.le.s32.totalorder 2, %s15
      // Predicated region
      $region41: #{tpu_custom_call.1} parent=5 // pred_check
        %p489 = pneg %p488
      $region42: #{tpu_custom_call.1} parent=5 // pred_check_branch
        %491 = sbr.rel (%p489) target = $region44
      $region43: #{tpu_custom_call.1} parent=5 // pred_region
        %s492 = ssub.s32 %s15, 2
        // Predicated region
        $region45: #{tpu_custom_call.1} parent=43 // pred_check
          %p493 = pneg %p112
        $region46: #{tpu_custom_call.1} parent=43 // pred_check_branch
          %495 = sbr.rel (%p493) target = $region48
        $region47: #{tpu_custom_call.1} parent=43 // pred_region
          %s496 = sand.u32 %s97, 1
          %s497 = scalar_lea.sflag [#allocation4], %s496
          %s498 = sand.u32 %s97, 1
          %s499 = smul.addr %s498, 512
          %s500 = scalar_lea.vmem [#allocation7], %s499
          %501 = dma.done %s497, 8192
        $region48: #{tpu_custom_call.1} parent=43 // pred_fallthru
          _
      $region44: #{tpu_custom_call.1} parent=5 // pred_fallthru
        _
    $region6: #{tpu_custom_call.1} parent=1 // loop_footer
      %s19 = sadd.s32 1, %s15
    $region7: #{tpu_custom_call.1} parent=1 // loop_footer_branch
      %14 = sbr.rel target = $region3
    $region8: #{tpu_custom_call.1} parent=1 // loop_exit
      _
    %502 = vsyncpa [#allocation3], 1
    %s503 = scalar_lea.sflag [#allocation3], 1
    %504 = vsyncpa %s503, 1
    %505 = vsyncpa [#allocation6], 1
    %506 = vsyncpa [#allocation4], 1
    %s507 = scalar_lea.sflag [#allocation4], 1
    %508 = vsyncpa %s507, 1

</llo_original>
